<compile_context>
chip_gen: v5e
topology: v5e:2x2
jax: 0.10.0
libtpu: 0.0.40
codegen_flags: <defaults>
</compile_context>

<pallas_src>
import jax
import jax.numpy as jnp
from jax.experimental import pallas as pl
from jax.experimental.pallas import tpu as pltpu

# Layer dims (in, out) of the PyTorch module: Linear(10,20) -> (20,18) -> (18,15) -> (15,1)
DIMS = ((10, 20), (20, 18), (18, 15), (15, 1))
# 8-aligned row offsets of each layer inside the packed parameter slab.
ROW_OFF = (0, 24, 48, 64)
BIAS_COL = 20        # weights occupy cols [0:fan_in] (fan_in <= 20); bias sits in col 20
P_ROWS = 72
P_COLS = 24


def mlp_kernel(p_ref, x_ref, o_ref):
    """One batch tile: h <- relu(W_l @ h + b_l) for l=1..3, then sigmoid(W_4 @ h + b_4).

    p_ref : (P_ROWS, P_COLS) f32 packed weights+biases, VMEM-resident across the grid.
    x_ref : (10, TB) bf16 input tile (batch on the lane axis).
    o_ref : (1, TB)  f32 output tile (lane-dense).
    """
    h = x_ref[...].astype(jnp.float32)  # cast once after load; all elementwise math in f32
    n_layers = len(DIMS)
    for li, (fan_in, fan_out) in enumerate(DIMS):
        r0 = ROW_OFF[li]
        w = p_ref[r0:r0 + fan_out, 0:fan_in]                  # (out, in) PyTorch layout
        b = p_ref[r0:r0 + fan_out, BIAS_COL:BIAS_COL + 1]     # (out, 1), broadcasts on lanes
        h = jnp.dot(w, h, preferred_element_type=jnp.float32) + b
        if li < n_layers - 1:
            h = jnp.maximum(h, 0.0)                           # ReLU
    # sigmoid(x) = 1 / (1 + exp(-x)); exp -> EUP, approx reciprocal -> EUP (no VALU divide)
    o_ref[...] = pl.reciprocal(1.0 + jnp.exp(-h), approx=True).astype(o_ref.dtype)


def mlp_forward(x, packed_params, *, block_b=2048, x_storage_dtype=jnp.bfloat16):
    """x: (B, 10) float; packed_params: (P_ROWS, P_COLS) f32 slab. Returns (B, 1) f32."""
    B, F = x.shape
    assert F == DIMS[0][0], f"expected {DIMS[0][0]} input features, got {F}"
    assert packed_params.shape == (P_ROWS, P_COLS)

    # Batch tile: multiple of 128 (full lane width); clamp to the 128-rounded batch so small
    # batches use one minimally-padded tile, large batches get big tiles (amortize DMA/step
    # overhead) while keeping padding waste <= one tile.
    b128 = pl.cdiv(B, 128) * 128
    block_b = max(128, (block_b // 128) * 128)
    block_b = min(block_b, b128)
    num_tiles = pl.cdiv(B, block_b)
    b_pad = num_tiles * block_b

    # CN layout: features on sublanes, batch on lanes; bf16 storage halves x HBM traffic.
    x_t = jnp.pad(x.astype(x_storage_dtype).T, ((0, 0), (0, b_pad - B)))

    out = pl.pallas_call(
        mlp_kernel,
        out_shape=jax.ShapeDtypeStruct((1, b_pad), jnp.float32),
        grid=(num_tiles,),
        in_specs=[
            # Parameter slab: constant block index -> fetched once, stays resident in VMEM.
            pl.BlockSpec((P_ROWS, P_COLS), lambda i: (0, 0)),
            # x tile: pipelined / double-buffered along the batch grid.
            pl.BlockSpec((F, block_b), lambda i: (0, i)),
        ],
        out_specs=pl.BlockSpec((1, block_b), lambda i: (0, i)),
        compiler_params=pltpu.CompilerParams(
            dimension_semantics=("parallel",),  # batch tiles shard over v7x's 2 TCs
        ),
    )(packed_params, x_t)

    return out[0, :B].reshape(B, 1)


def mlp_reference(x, packed_params, x_storage_dtype=jnp.bfloat16):
    """Pure-JAX reference (same bf16 input rounding) for correctness checking."""
    h = x.astype(x_storage_dtype).astype(jnp.float32).T
    for li, (fan_in, fan_out) in enumerate(DIMS):
        r0 = ROW_OFF[li]
        w = packed_params[r0:r0 + fan_out, 0:fan_in]
        b = packed_params[r0:r0 + fan_out, BIAS_COL:BIAS_COL + 1]
        h = w @ h + b
        if li < len(DIMS) - 1:
            h = jnp.maximum(h, 0.0)
    return jax.nn.sigmoid(h).T  # (B, 1)


def init_params(key):
    """Mirror MLP.initialize_weights(): xavier-normal weights, biases filled with 0.01,
    packed into a single (P_ROWS, P_COLS) f32 slab (one DMA, ~6.9 KB)."""
    slab = jnp.zeros((P_ROWS, P_COLS), dtype=jnp.float32)
    keys = jax.random.split(key, len(DIMS))
    for (fan_in, fan_out), r0, k in zip(DIMS, ROW_OFF, keys):
        std = (2.0 / (fan_in + fan_out)) ** 0.5           # xavier_normal_, gain=1
        w = std * jax.random.normal(k, (fan_out, fan_in), dtype=jnp.float32)  # (out, in)
        slab = slab.at[r0:r0 + fan_out, :fan_in].set(w)
        slab = slab.at[r0:r0 + fan_out, BIAS_COL].set(0.01)
    return slab


if __name__ == "__main__":
    key = jax.random.PRNGKey(0)
    k_param, k_x, k_x2 = jax.random.split(key, 3)

    params = init_params(k_param)

    # Primary small-shape test (single tile path).
    batch = 8
    x = jax.random.normal(k_x, (batch, DIMS[0][0]), dtype=jnp.float32)
    out = jax.block_until_ready(mlp_forward(x, params))
    assert out.shape == (batch, 1)
    assert bool(jnp.all((out > 0.0) & (out < 1.0)))
    ref = mlp_reference(x, params)
    assert bool(jnp.allclose(out, ref, atol=1e-2)), (out, ref)

    # Multi-tile path (ragged batch, 3 grid steps with a 128-lane tile) to exercise the grid.
    batch2 = 300
    x2 = jax.random.normal(k_x2, (batch2, DIMS[0][0]), dtype=jnp.float32)
    out2 = jax.block_until_ready(mlp_forward(x2, params, block_b=128))
    ref2 = mlp_reference(x2, params)
    assert out2.shape == (batch2, 1)
    assert bool(jnp.allclose(out2, ref2, atol=1e-2))

    print("KERNEL_OK")
</pallas_src>

<mosaic_0001>
module attributes {stable_mosaic.version = 11 : i64} {
  func.func @mlp_kernel(%arg0: i32, %arg1: memref<72x24xf32, #tpu.memory_space<vmem>>, %arg2: memref<10x128xbf16, #tpu.memory_space<vmem>>, %arg3: memref<1x128xf32, #tpu.memory_space<vmem>>) attributes {dimension_semantics = [#tpu.dimension_semantics<parallel>], iteration_bounds = array<i64: 1>, scalar_prefetch = 0 : i64, scratch_operands = 0 : i64, tpu.core_type = #tpu.core_type<tc>, window_params = [{pipeline_mode = #tpu.pipeline_mode<synchronous>, transform_indices = @transform_0, window_bounds = array<i64: 72, 24>}, {transform_indices = @transform_1, window_bounds = array<i64: 10, 128>}, {transform_indices = @transform_2, window_bounds = array<i64: 1, 128>}]} {
    %c0 = arith.constant 0 : index
    %c0_0 = arith.constant 0 : index
    %0 = vector.load %arg2[%c0, %c0_0] : memref<10x128xbf16, #tpu.memory_space<vmem>>, vector<10x128xbf16>
    %1 = arith.extf %0 : vector<10x128xbf16> to vector<10x128xf32>
    %c0_1 = arith.constant 0 : index
    %c0_2 = arith.constant 0 : index
    %2 = vector.load %arg1[%c0_1, %c0_2] : memref<72x24xf32, #tpu.memory_space<vmem>>, vector<20x10xf32>
    %c0_3 = arith.constant 0 : index
    %c20 = arith.constant 20 : index
    %3 = vector.load %arg1[%c0_3, %c20] : memref<72x24xf32, #tpu.memory_space<vmem>>, vector<20x1xf32>
    %cst = arith.constant dense<0.000000e+00> : vector<20x128xf32>
    %4 = tpu.matmul %2, %1, %cst {dimension_numbers = #tpu.dot_dimension_numbers<[1], [0], [0], [1], [0, 0, 1, 1], [], []>} : vector<20x10xf32>, vector<10x128xf32>, vector<20x128xf32> -> vector<20x128xf32>
    %5 = vector.broadcast %3 : vector<20x1xf32> to vector<20x128xf32>
    %6 = arith.addf %4, %5 : vector<20x128xf32>
    %cst_4 = arith.constant 0.000000e+00 : f32
    %7 = vector.broadcast %cst_4 : f32 to vector<20x128xf32>
    %8 = arith.maximumf %6, %7 : vector<20x128xf32>
    %c24 = arith.constant 24 : index
    %c0_5 = arith.constant 0 : index
    %9 = vector.load %arg1[%c24, %c0_5] : memref<72x24xf32, #tpu.memory_space<vmem>>, vector<18x20xf32>
    %c24_6 = arith.constant 24 : index
    %c20_7 = arith.constant 20 : index
    %10 = vector.load %arg1[%c24_6, %c20_7] : memref<72x24xf32, #tpu.memory_space<vmem>>, vector<18x1xf32>
    %cst_8 = arith.constant dense<0.000000e+00> : vector<18x128xf32>
    %11 = tpu.matmul %9, %8, %cst_8 {dimension_numbers = #tpu.dot_dimension_numbers<[1], [0], [0], [1], [0, 0, 1, 1], [], []>} : vector<18x20xf32>, vector<20x128xf32>, vector<18x128xf32> -> vector<18x128xf32>
    %12 = vector.broadcast %10 : vector<18x1xf32> to vector<18x128xf32>
    %13 = arith.addf %11, %12 : vector<18x128xf32>
    %cst_9 = arith.constant 0.000000e+00 : f32
    %14 = vector.broadcast %cst_9 : f32 to vector<18x128xf32>
    %15 = arith.maximumf %13, %14 : vector<18x128xf32>
    %c48 = arith.constant 48 : index
    %c0_10 = arith.constant 0 : index
    %16 = vector.load %arg1[%c48, %c0_10] : memref<72x24xf32, #tpu.memory_space<vmem>>, vector<15x18xf32>
    %c48_11 = arith.constant 48 : index
    %c20_12 = arith.constant 20 : index
    %17 = vector.load %arg1[%c48_11, %c20_12] : memref<72x24xf32, #tpu.memory_space<vmem>>, vector<15x1xf32>
    %cst_13 = arith.constant dense<0.000000e+00> : vector<15x128xf32>
    %18 = tpu.matmul %16, %15, %cst_13 {dimension_numbers = #tpu.dot_dimension_numbers<[1], [0], [0], [1], [0, 0, 1, 1], [], []>} : vector<15x18xf32>, vector<18x128xf32>, vector<15x128xf32> -> vector<15x128xf32>
    %19 = vector.broadcast %17 : vector<15x1xf32> to vector<15x128xf32>
    %20 = arith.addf %18, %19 : vector<15x128xf32>
    %cst_14 = arith.constant 0.000000e+00 : f32
    %21 = vector.broadcast %cst_14 : f32 to vector<15x128xf32>
    %22 = arith.maximumf %20, %21 : vector<15x128xf32>
    %c64 = arith.constant 64 : index
    %c0_15 = arith.constant 0 : index
    %23 = vector.load %arg1[%c64, %c0_15] : memref<72x24xf32, #tpu.memory_space<vmem>>, vector<1x15xf32>
    %c64_16 = arith.constant 64 : index
    %c20_17 = arith.constant 20 : index
    %24 = vector.load %arg1[%c64_16, %c20_17] : memref<72x24xf32, #tpu.memory_space<vmem>>, vector<1x1xf32>
    %cst_18 = arith.constant dense<0.000000e+00> : vector<1x128xf32>
    %25 = tpu.matmul %23, %22, %cst_18 {dimension_numbers = #tpu.dot_dimension_numbers<[1], [0], [0], [1], [0, 0, 1, 1], [], []>} : vector<1x15xf32>, vector<15x128xf32>, vector<1x128xf32> -> vector<1x128xf32>
    %26 = vector.broadcast %24 : vector<1x1xf32> to vector<1x128xf32>
    %27 = arith.addf %25, %26 : vector<1x128xf32>
    %cst_19 = arith.constant 0.000000e+00 : f32
    %28 = vector.broadcast %cst_19 : f32 to vector<1x128xf32>
    %29 = arith.subf %28, %27 : vector<1x128xf32>
    %30 = math.exp %29 : vector<1x128xf32>
    %cst_20 = arith.constant 1.000000e+00 : f32
    %31 = vector.broadcast %cst_20 : f32 to vector<1x128xf32>
    %32 = arith.addf %31, %30 : vector<1x128xf32>
    %33 = tpu.reciprocal %32 {approx = true} : vector<1x128xf32> -> vector<1x128xf32>
    %c0_21 = arith.constant 0 : index
    %c0_22 = arith.constant 0 : index
    %34 = vector.load %arg3[%c0_21, %c0_22] : memref<1x128xf32, #tpu.memory_space<vmem>>, vector<1x128xf32>
    tpu.vector_store %arg3[%c0_21, %c0_22], %33 {strides = array<i32>} : memref<1x128xf32, #tpu.memory_space<vmem>>, vector<1x128xf32>,
    return
  }
  func.func @transform_0(%arg0: i32) -> (i32, i32) {
    %c0_i32 = arith.constant 0 : i32
    %c0_i32_0 = arith.constant 0 : i32
    %c0_i32_1 = arith.constant 0 : i32
    return %c0_i32, %c0_i32_0 : i32, i32
  }
  func.func @transform_1(%arg0: i32) -> (i32, i32) {
    %c0_i32 = arith.constant 0 : i32
    %c0_i32_0 = arith.constant 0 : i32
    return %c0_i32, %arg0 : i32, i32
  }
  func.func @transform_2(%arg0: i32) -> (i32, i32) {
    %c0_i32 = arith.constant 0 : i32
    %c0_i32_0 = arith.constant 0 : i32
    return %c0_i32, %arg0 : i32, i32
  }
}

</mosaic_0001>

<llo_original>
// kernel: tpu_custom_call.1
$region0: #{tpu_custom_call.1}
  #allocation0 [shape = 'u32[]', space=smem, size = 0x4, offset = 0x4, fixed_abs, tag = 'smem constant byte address 0x4 - core index']
  #allocation1 [shape = 'u32[72,128]{1,0:T(1,128)}', space=vmem, size = 0x9000, scoped, tag = 'internal scratch']
  %s0 = inlined_call_operand.vmem [shape: f32[72,24], index: 0, kind: input, shape index: {}]
  %s1 = inlined_call_operand.vmem [shape: bf16[10,128], index: 1, kind: input, shape index: {}]
  %s2 = inlined_call_operand.hbm [shape: f32[1,128], index: 2, kind: output, shape index: {}]
  %s3 = sld [smem:[#allocation0]]
  $region18: #{tpu_custom_call.1} parent=0
    _
  %s5 = ssub.s32 1, %s3
  %s6 = scalar_select 0, %s5, %s3
  $region1: #{tpu_custom_call.1} parent=0
    #allocation2 [shape = 'u8[512]{0}', space=vmem, size = 0x400, scoped, tag = 'output window, operand 0, single buffered']
    #allocation3 [shape = 's32[1]{0}', space=sflag, size = 0x4, scoped, tag = 'scoped memory for tpu_custom_call.1']
    %7 = vsyncpa [#allocation3], 0
    // Predicated region
    $region2: #{tpu_custom_call.1} parent=1 // pred_check
      _
    $region3: #{tpu_custom_call.1} parent=1 // pred_check_branch
      %9 = sbr.rel (0) target = $region5
    $region4: #{tpu_custom_call.1} parent=1 // pred_region
      _
    $region5: #{tpu_custom_call.1} parent=1 // pred_fallthru
      _
    // Predicated region
    $region6: #{tpu_custom_call.1} parent=1 // pred_check
      _
    $region7: #{tpu_custom_call.1} parent=1 // pred_check_branch
      %11 = sbr.rel (0) target = $region9
    $region8: #{tpu_custom_call.1} parent=1 // pred_region
      _
    $region9: #{tpu_custom_call.1} parent=1 // pred_fallthru
      _
    %v12 = vld [vmem:[%s1] sm:$0xf]
    %v13 = vld [vmem:[%s1 + $0x4] sm:$0x1]
    %v14 = vunpack.c.l.bf16 %v12
    %v15 = vunpack.c.l.bf16 %v13
    %v16 = vld [vmem:[%s0] sm:$0xff]
    %v17 = vld [vmem:[%s0 + $0x8] sm:$0xff]
    %v18 = vld [vmem:[%s0 + $0x10] sm:$0xf]
    %20 = vset.pattern.permute.xlu0 20
    %21 = vperm.xlu0 %20, %v16
    %v22 = vpop.permute.xlu0 %21
    %25 = vset.pattern.permute.xlu0 20
    %26 = vperm.xlu0 %25, %v17
    %v27 = vpop.permute.xlu0 %26
    %30 = vset.pattern.permute.xlu0 20
    %31 = vperm.xlu0 %30, %v18
    %v32 = vpop.permute.xlu0 %31
    %vm34 = vcmask 80896
    %v35 = vsel %vm34, %v16, 0
    %v37 = vsel %vm34, %v17, 0
    %v39 = vsel %vm34, %v18, 0
    %vm41 = vcmask 1041408
    %v43 = vsel %vm41, %v15, 0
    %45 = vmatpush.msra.mxu0 0.0
    %46 = vmatpush.msra.mxu0 0.0
    %47 = vmatpush.msra.mxu0 0.0
    %48 = vmatpush.msra.mxu0 0.0
    %49 = vmatpush.msra.mxu0 0.0
    %50 = vmatpush.msra.mxu0 0.0
    %51 = vmatpush.msra.mxu0 0.0
    %52 = vmatpush.msra.mxu0 0.0
    %53 = vmatpush.msra.mxu0 0.0
    %54 = vmatpush.msra.mxu0 0.0
    %55 = vmatpush.msra.mxu0 0.0
    %56 = vmatpush.msra.mxu0 0.0
    %57 = vmatpush.msra.mxu0 0.0
    %58 = vmatpush.msra.mxu0 0.0
    %59 = vmatpush.msra.mxu0 %v43
    %60 = vmatpush.msra.mxu0 %v14
    %61 = vmatmul.f32.gmra.mxu0 %v35
    %v62 = vpop.f32.mrf.mxu0
    %v63 = vadd.f32 %v22, %v62
    %64 = vmatmul.f32.gmra.mxu0 %v37
    %v65 = vpop.f32.mrf.mxu0
    %v66 = vadd.f32 %v27, %v65
    %67 = vmatmul.f32.gmra.mxu0 %v39
    %v68 = vpop.f32.mrf.mxu0
    %v69 = vadd.f32 %v32, %v68
    %70 = vdwg.mxu0
    %v71 = vmax.f32 %v63, 0.0
    %v72 = vmax.f32 %v66, 0.0
    %v73 = vmax.f32 %v69, 0.0
    %v74 = vld [vmem:[%s0 + $0x18] sm:$0xff]
    %v75 = vld [vmem:[%s0 + $0x20] sm:$0xff]
    %v76 = vld [vmem:[%s0 + $0x28] sm:$0x3]
    %78 = vset.pattern.permute.xlu0 20
    %79 = vperm.xlu0 %78, %v74
    %v80 = vpop.permute.xlu0 %79
    %83 = vset.pattern.permute.xlu0 20
    %84 = vperm.xlu0 %83, %v75
    %v85 = vpop.permute.xlu0 %84
    %88 = vset.pattern.permute.xlu0 20
    %89 = vperm.xlu0 %88, %v76
    %v90 = vpop.permute.xlu0 %89
    %vm92 = vcmask 162816
    %v93 = vsel %vm92, %v74, 0
    %v95 = vsel %vm92, %v75, 0
    %v97 = vsel %vm92, %v76, 0
    %vm99 = vcmask 1043456
    %v101 = vsel %vm99, %v73, 0
    %103 = vmatpush.msra.mxu0 0.0
    %104 = vmatpush.msra.mxu0 0.0
    %105 = vmatpush.msra.mxu0 0.0
    %106 = vmatpush.msra.mxu0 0.0
    %107 = vmatpush.msra.mxu0 0.0
    %108 = vmatpush.msra.mxu0 0.0
    %109 = vmatpush.msra.mxu0 0.0
    %110 = vmatpush.msra.mxu0 0.0
    %111 = vmatpush.msra.mxu0 0.0
    %112 = vmatpush.msra.mxu0 0.0
    %113 = vmatpush.msra.mxu0 0.0
    %114 = vmatpush.msra.mxu0 0.0
    %115 = vmatpush.msra.mxu0 0.0
    %116 = vmatpush.msra.mxu0 %v101
    %117 = vmatpush.msra.mxu0 %v72
    %118 = vmatpush.msra.mxu0 %v71
    %119 = vmatmul.f32.gmra.mxu0 %v93
    %v120 = vpop.f32.mrf.mxu0
    %v121 = vadd.f32 %v80, %v120
    %122 = vmatmul.f32.gmra.mxu0 %v95
    %v123 = vpop.f32.mrf.mxu0
    %v124 = vadd.f32 %v85, %v123
    %125 = vmatmul.f32.gmra.mxu0 %v97
    %v126 = vpop.f32.mrf.mxu0
    %v127 = vadd.f32 %v90, %v126
    %128 = vdwg.mxu0
    %v129 = vmax.f32 %v121, 0.0
    %v130 = vmax.f32 %v124, 0.0
    %v131 = vmax.f32 %v127, 0.0
    %v132 = vld [vmem:[%s0 + $0x30] sm:$0xff]
    %v133 = vld [vmem:[%s0 + $0x38] sm:$0x7f]
    %135 = vset.pattern.permute.xlu0 20
    %136 = vperm.xlu0 %135, %v132
    %v137 = vpop.permute.xlu0 %136
    %140 = vset.pattern.permute.xlu0 20
    %141 = vperm.xlu0 %140, %v133
    %v142 = vpop.permute.xlu0 %141
    %vm144 = vcmask 146432
    %v145 = vsel %vm144, %v132, 0
    %v147 = vsel %vm144, %v133, 0
    %v150 = vsel %vm41, %v131, 0
    %152 = vmatpush.msra.mxu0 0.0
    %153 = vmatpush.msra.mxu0 0.0
    %154 = vmatpush.msra.mxu0 0.0
    %155 = vmatpush.msra.mxu0 0.0
    %156 = vmatpush.msra.mxu0 0.0
    %157 = vmatpush.msra.mxu0 0.0
    %158 = vmatpush.msra.mxu0 0.0
    %159 = vmatpush.msra.mxu0 0.0
    %160 = vmatpush.msra.mxu0 0.0
    %161 = vmatpush.msra.mxu0 0.0
    %162 = vmatpush.msra.mxu0 0.0
    %163 = vmatpush.msra.mxu0 0.0
    %164 = vmatpush.msra.mxu0 0.0
    %165 = vmatpush.msra.mxu0 %v150
    %166 = vmatpush.msra.mxu0 %v130
    %167 = vmatpush.msra.mxu0 %v129
    %168 = vmatmul.f32.gmra.mxu0 %v145
    %v169 = vpop.f32.mrf.mxu0
    %v170 = vadd.f32 %v137, %v169
    %171 = vmatmul.f32.gmra.mxu0 %v147
    %v172 = vpop.f32.mrf.mxu0
    %v173 = vadd.f32 %v142, %v172
    %174 = vdwg.mxu0
    %v175 = vmax.f32 %v170, 0.0
    %v176 = vmax.f32 %v173, 0.0
    %v177 = vld [vmem:[%s0 + $0x40] sm:$0x1]
    %179 = vset.pattern.permute.xlu0 20
    %180 = vperm.xlu0 %179, %v177
    %v181 = vpop.permute.xlu0 %180
    %vm183 = vcmask 121856
    %v184 = vsel %vm183, %v177, 0
    %vm186 = vcmask 1046528
    %v188 = vsel %vm186, %v176, 0
    %190 = vmatpush.msra.mxu0 0.0
    %191 = vmatpush.msra.mxu0 0.0
    %192 = vmatpush.msra.mxu0 0.0
    %193 = vmatpush.msra.mxu0 0.0
    %194 = vmatpush.msra.mxu0 0.0
    %195 = vmatpush.msra.mxu0 0.0
    %196 = vmatpush.msra.mxu0 0.0
    %197 = vmatpush.msra.mxu0 0.0
    %198 = vmatpush.msra.mxu0 0.0
    %199 = vmatpush.msra.mxu0 0.0
    %200 = vmatpush.msra.mxu0 0.0
    %201 = vmatpush.msra.mxu0 0.0
    %202 = vmatpush.msra.mxu0 0.0
    %203 = vmatpush.msra.mxu0 0.0
    %204 = vmatpush.msra.mxu0 %v188
    %205 = vmatpush.msra.mxu0 %v175
    %206 = vmatmul.f32.gmra.mxu0 %v184
    %v207 = vpop.f32.mrf.mxu0
    %v208 = vadd.f32 %v181, %v207
    %209 = vdwg.mxu0
    %v210 = vsub.f32 0.0, %v208
    %v211 = vmul.f32 %v210, 1.442695
    %v212 = vpow.pop %v211
    %v213 = vadd.f32 %v212, 1.0
    %v214 = vrcp.pop %v213
    %215 = vst [vmem:[#allocation2] sm:$0x1] %v214
    // Predicated region
    $region10: #{tpu_custom_call.1} parent=1 // pred_check
      _
    $region11: #{tpu_custom_call.1} parent=1 // pred_check_branch
      %217 = sbr.rel (0) target = $region13
    $region12: #{tpu_custom_call.1} parent=1 // pred_region
      %219 = vsyncadd [#allocation3], 0
      %s221 = sshll.u32 [#allocation2], 4
      %s222 = int_to_ptr.vmem [resolvable:$true] %s221
      %s223 = sshll.u32 %s2, 4
      %s224 = int_to_ptr.hbm [resolvable:$true] %s223
      %226 = dma.vmem_to_hbm [thread:$0]  %s222, 16, %s224, [#allocation3]
    $region13: #{tpu_custom_call.1} parent=1 // pred_fallthru
      _
    // Predicated region
    $region14: #{tpu_custom_call.1} parent=1 // pred_check
      _
    $region15: #{tpu_custom_call.1} parent=1 // pred_check_branch
      %228 = sbr.rel (0) target = $region17
    $region16: #{tpu_custom_call.1} parent=1 // pred_region
      %230 = dma.done [#allocation3], 16
    $region17: #{tpu_custom_call.1} parent=1 // pred_fallthru
      _
    %231 = vsyncpa [#allocation3], 1

</llo_original>
